<compile_context>
chip_gen: v7x
topology: tpu7x:2x2x1
jax: 0.10.0
libtpu: 0.0.40
codegen_flags: <defaults>
</compile_context>

<pallas_src>
import math

import jax
import jax.numpy as jnp
from jax.experimental import pallas as pl
from jax.experimental.pallas import tpu as pltpu


def _drop_path_kernel(scale_ref, x_ref, o_ref):
    # scale_ref: (BS, 1) in x.dtype; x_ref / o_ref: (BS, TILE) in x.dtype.
    # Single fused multiply in the input dtype, broadcast over the lane axis.
    o_ref[...] = x_ref[...] * scale_ref[...]


def _choose_block(B, F, itemsize, block_bytes):
    """Pick (BS, TILE) so blocks are lane-dense and roughly block_bytes big."""
    bytes_per_row = max(F * itemsize, 1)
    if bytes_per_row > block_bytes:
        # One sample per block; tile the flattened feature axis in lane-dense
        # multiples of 128.
        tile = max(128, (block_bytes // itemsize) // 128 * 128)
        tile = min(tile, F)
        return 1, tile
    # Whole rows fit: pack several samples per block.
    rows = max(1, block_bytes // bytes_per_row)
    if rows >= B:
        return B, F
    if rows >= 8:
        rows = (rows // 8) * 8  # keep the sublane dim 8-aligned
    return rows, F


def drop_path_pallas(x, key, drop_prob: float = 0.0, training: bool = False,
                     *, block_bytes: int = 2 * 1024 * 1024):
    """Pallas implementation of mae.utils.drop_path (per-sample stochastic depth)."""
    if drop_prob == 0.0 or not training:
        return x
    keep_prob = 1.0 - drop_prob
    if keep_prob <= 0.0:
        # torch reference would produce x/0 * 0 = NaN here; every path is
        # dropped, so return zeros (guard per review).
        return jnp.zeros_like(x)

    B = x.shape[0]
    F = int(math.prod(x.shape[1:]))
    x2 = x.reshape(B, F)  # free: collapses trailing row-major dims

    # Per-sample keep/drop mask, same semantics as the torch reference:
    # floor(keep_prob + U[0,1)) is 1 with prob keep_prob, else 0.
    u = jax.random.uniform(key, (B,), dtype=jnp.float32)
    scale = (jnp.floor(keep_prob + u) * (1.0 / keep_prob)).astype(x.dtype)
    scale = scale.reshape(B, 1)

    BS, TILE = _choose_block(B, F, x.dtype.itemsize, block_bytes)
    grid = (pl.cdiv(B, BS), pl.cdiv(F, TILE))

    out = pl.pallas_call(
        _drop_path_kernel,
        out_shape=jax.ShapeDtypeStruct((B, F), x.dtype),
        grid=grid,
        in_specs=[
            pl.BlockSpec((BS, 1), lambda i, j: (i, 0)),
            pl.BlockSpec((BS, TILE), lambda i, j: (i, j)),
        ],
        out_specs=pl.BlockSpec((BS, TILE), lambda i, j: (i, j)),
        compiler_params=pltpu.CompilerParams(
            dimension_semantics=("parallel", "parallel")),
    )(scale, x2)
    # TODO(synk): skipping the HBM read of fully-dropped samples (manual DMA
    # gated on scale != 0) and/or fusing this multiply into the adjacent
    # residual-add would remove most of the remaining HBM traffic.
    return out.reshape(x.shape)


class DropPath:
    """Mirror of the PyTorch DropPath module (stateless, no parameters)."""

    def __init__(self, drop_prob=None):
        self.drop_prob = drop_prob
        self.training = True

    def __call__(self, x, key):
        p = 0.0 if self.drop_prob is None else float(self.drop_prob)
        return drop_path_pallas(x, key, p, self.training)


if __name__ == "__main__":
    key = jax.random.PRNGKey(0)
    k_x, k_mask = jax.random.split(key)

    B, N, D = 2, 8, 32
    x = jax.random.normal(k_x, (B, N, D), dtype=jnp.float32)

    drop_prob = 0.5
    keep_prob = 1.0 - drop_prob
    u = jax.random.uniform(k_mask, (B,), dtype=jnp.float32)
    mask = jnp.floor(keep_prob + u).reshape(B, 1, 1)
    ref = (x / keep_prob) * mask

    module = DropPath(drop_prob=drop_prob)
    module.training = True

    # 1) Default path: whole flattened rows, samples packed per block (BS=B).
    out = jax.block_until_ready(module(x, k_mask))
    assert out.shape == x.shape and out.dtype == x.dtype
    assert jnp.allclose(out, ref, atol=1e-6, rtol=1e-6), "mismatch vs reference"

    # 2) Multi-sample packed blocks with BS < B (aligned 8-row blocks).
    B2, F2 = 16, 1024
    xp = jax.random.normal(jax.random.PRNGKey(1), (B2, F2), dtype=jnp.float32)
    up = jax.random.uniform(k_mask, (B2,), dtype=jnp.float32)
    refp = (xp / keep_prob) * jnp.floor(keep_prob + up).reshape(B2, 1)
    outp = jax.block_until_ready(
        drop_path_pallas(xp, k_mask, drop_prob, True, block_bytes=32 * 1024))
    assert jnp.allclose(outp, refp, atol=1e-6, rtol=1e-6), "packed path mismatch"

    # 3) Feature-tiled path (forces TILE=128, BS=1, grid=(2, 2)).
    out_tiled = jax.block_until_ready(
        drop_path_pallas(x, k_mask, drop_prob, True, block_bytes=512))
    assert jnp.allclose(out_tiled, ref, atol=1e-6, rtol=1e-6), "tiled path mismatch"

    # 4) bf16 activations: multiply stays in the input dtype (no f32 round trip).
    x_bf16 = x.astype(jnp.bfloat16)
    out_bf16 = jax.block_until_ready(
        drop_path_pallas(x_bf16, k_mask, drop_prob, True))
    scale_bf16 = (jnp.floor(keep_prob + u) / keep_prob).astype(jnp.bfloat16)
    ref_bf16 = x_bf16 * scale_bf16.reshape(B, 1, 1)
    assert out_bf16.dtype == jnp.bfloat16
    assert jnp.allclose(out_bf16.astype(jnp.float32),
                        ref_bf16.astype(jnp.float32), atol=1e-2)

    # 5) Eval / drop_prob=0 path: identity.
    module.training = False
    out_eval = jax.block_until_ready(module(x, k_mask))
    assert jnp.array_equal(out_eval, x)

    # 6) drop_prob=1.0 guard: all paths dropped, no NaNs.
    out_all_drop = jax.block_until_ready(drop_path_pallas(x, k_mask, 1.0, True))
    assert jnp.array_equal(out_all_drop, jnp.zeros_like(x))

    print("KERNEL_OK")
</pallas_src>

<mosaic_0001>
module attributes {stable_mosaic.version = 11 : i64} {
  func.func @_drop_path_kernel(%arg0: i32, %arg1: i32, %arg2: memref<2x1xf32, #tpu.memory_space<vmem>>, %arg3: memref<2x256xf32, #tpu.memory_space<vmem>>, %arg4: memref<2x256xf32, #tpu.memory_space<vmem>>) attributes {dimension_semantics = [#tpu.dimension_semantics<parallel>, #tpu.dimension_semantics<parallel>], iteration_bounds = array<i64: 1, 1>, scalar_prefetch = 0 : i64, scratch_operands = 0 : i64, tpu.core_type = #tpu.core_type<tc>, window_params = [{transform_indices = @transform_0, window_bounds = array<i64: 2, 1>}, {transform_indices = @transform_1, window_bounds = array<i64: 2, 256>}, {transform_indices = @transform_2, window_bounds = array<i64: 2, 256>}]} {
    %c0 = arith.constant 0 : index
    %c0_0 = arith.constant 0 : index
    %0 = vector.load %arg3[%c0, %c0_0] : memref<2x256xf32, #tpu.memory_space<vmem>>, vector<2x256xf32>
    %c0_1 = arith.constant 0 : index
    %c0_2 = arith.constant 0 : index
    %1 = vector.load %arg2[%c0_1, %c0_2] : memref<2x1xf32, #tpu.memory_space<vmem>>, vector<2x1xf32>
    %2 = vector.broadcast %1 : vector<2x1xf32> to vector<2x256xf32>
    %3 = arith.mulf %0, %2 : vector<2x256xf32>
    %c0_3 = arith.constant 0 : index
    %c0_4 = arith.constant 0 : index
    %4 = vector.load %arg4[%c0_3, %c0_4] : memref<2x256xf32, #tpu.memory_space<vmem>>, vector<2x256xf32>
    tpu.vector_store %arg4[%c0_3, %c0_4], %3 {strides = array<i32>} : memref<2x256xf32, #tpu.memory_space<vmem>>, vector<2x256xf32>,
    return
  }
  func.func @transform_0(%arg0: i32, %arg1: i32) -> (i32, i32) {
    %c0_i32 = arith.constant 0 : i32
    %c0_i32_0 = arith.constant 0 : i32
    return %arg0, %c0_i32 : i32, i32
  }
  func.func @transform_1(%arg0: i32, %arg1: i32) -> (i32, i32) {
    %c0_i32 = arith.constant 0 : i32
    return %arg0, %arg1 : i32, i32
  }
  func.func @transform_2(%arg0: i32, %arg1: i32) -> (i32, i32) {
    %c0_i32 = arith.constant 0 : i32
    return %arg0, %arg1 : i32, i32
  }
}

</mosaic_0001>

<llo_original>
// kernel: tpu_custom_call.1
$region0: #{tpu_custom_call.1}
  #allocation0 [shape = 'u32[]', space=smem, size = 0x4, offset = 0x4, fixed_abs, tag = 'smem constant byte address 0x4 - core index']
  #allocation1 [shape = 'u32[144,128]{1,0:T(1,128)}', space=vmem, size = 0x12000, scoped, tag = 'internal scratch']
  %s0 = inlined_call_operand.vmem [shape: f32[2,1], index: 0, kind: input, shape index: {}]
  %s1 = inlined_call_operand.vmem [shape: f32[2,256], index: 1, kind: input, shape index: {}]
  %s2 = inlined_call_operand.hbm [shape: f32[2,256], index: 2, kind: output, shape index: {}]
  %s3 = sld [smem:[#allocation0]]
  $region18: #{tpu_custom_call.1} parent=0
    _
  %s5 = ssub.s32 1, %s3
  %s6 = scalar_select 0, %s5, %s3
  $region1: #{tpu_custom_call.1} parent=0
    #allocation2 [shape = 'u8[2048]{0}', space=vmem, size = 0x800, scoped, tag = 'output window, operand 0, single buffered']
    #allocation3 [shape = 's32[1]{0}', space=sflag, size = 0x4, scoped, tag = 'scoped memory for tpu_custom_call.1']
    %7 = vsyncpa [#allocation3], 0
    // Predicated region
    $region2: #{tpu_custom_call.1} parent=1 // pred_check
      _
    $region3: #{tpu_custom_call.1} parent=1 // pred_check_branch
      %9 = sbr.rel (0) target = $region5
    $region4: #{tpu_custom_call.1} parent=1 // pred_region
      _
    $region5: #{tpu_custom_call.1} parent=1 // pred_fallthru
      _
    // Predicated region
    $region6: #{tpu_custom_call.1} parent=1 // pred_check
      _
    $region7: #{tpu_custom_call.1} parent=1 // pred_check_branch
      %11 = sbr.rel (0) target = $region9
    $region8: #{tpu_custom_call.1} parent=1 // pred_region
      _
    $region9: #{tpu_custom_call.1} parent=1 // pred_fallthru
      _
    %v12 = vld [vmem:[%s1] sm:$0xf]
    %v13 = vld [vmem:[%s0] sm:$0x3]
    %15 = vset.pattern.permute.xlu0 0
    %16 = vperm.xlu0 %15, %v13
    %v17 = vpop.permute.xlu0 %16
    %v19 = vunpack.c.l.s4 269488144
    %v20 = vunpack.c.0.s8 %v19
    %v21 = vlaneseq
    %v22 = vshrl.u32 %v21, 7
    %v23 = vsub.s32 %v20, %v22
    %v24 = vrot.slane %v17, %v23
    %v26 = vmul.f32 %v12, %v24
    %27 = vst [vmem:[#allocation2] sm:$0xf] %v26
    // Predicated region
    $region10: #{tpu_custom_call.1} parent=1 // pred_check
      _
    $region11: #{tpu_custom_call.1} parent=1 // pred_check_branch
      %29 = sbr.rel (0) target = $region13
    $region12: #{tpu_custom_call.1} parent=1 // pred_region
      %s31 = ssub.s32 64, 64
      %32 = vsyncadd [#allocation3], %s31
      %s34 = sshll.u32 [#allocation2], 4
      %s35 = int_to_ptr.vmem [resolvable:$true] %s34
      %37 = dma.vmem_to_hbm [thread:$0]  %s35, 64, %s2, [#allocation3]
    $region13: #{tpu_custom_call.1} parent=1 // pred_fallthru
      _
    // Predicated region
    $region14: #{tpu_custom_call.1} parent=1 // pred_check
      _
    $region15: #{tpu_custom_call.1} parent=1 // pred_check_branch
      %39 = sbr.rel (0) target = $region17
    $region16: #{tpu_custom_call.1} parent=1 // pred_region
      %40 = dma.done [#allocation3], 64
    $region17: #{tpu_custom_call.1} parent=1 // pred_fallthru
      _
    %41 = vsyncpa [#allocation3], 1

</llo_original>
